<compile_context>
chip_gen: v7x
topology: tpu7x:2x2x1
jax: 0.10.0
libtpu: 0.0.40
codegen_flags: <defaults>
</compile_context>

<pallas_src>
import functools

import jax
import jax.numpy as jnp
from jax import lax
from jax.experimental import pallas as pl
from jax.experimental.pallas import tpu as pltpu

_NEG_SENTINEL = -1e30   # behaves like -inf for masking / exp underflow
_POS_SENTINEL = 1e30    # behaves like +inf for the positive min


def _pick_tile_n(N, D, bank_itemsize, target_tile_bytes=2 * 1024 * 1024):
    """Largest multiple-of-128 divisor of N whose (tile, D) slab stays modest."""
    if N % 128 != 0:
        return N
    cols = max(128, (target_tile_bytes // max(1, D * bank_itemsize)) // 128 * 128)
    t = min(N, int(cols))
    while t >= 128:
        if N % t == 0:
            return t
        t -= 128
    return N


# --------------------------------------------------------------------------------------
# Loss kernel: tiled over the memory-bank axis N.
# --------------------------------------------------------------------------------------
def _memory_loss_kernel(f_ref, bank_ref, labels_ref, blabels_ref, loss_ref,
                        neg_ref, posmin_ref, *, inv_temp, K, compute_dtype):
    n = pl.program_id(0)
    n_tiles = pl.num_programs(0)
    B = f_ref.shape[0]

    @pl.when(n == 0)
    def _init():
        posmin_ref[...] = jnp.full(posmin_ref.shape, _POS_SENTINEL, jnp.float32)

    # (B, D) x (TILE_N, D) contracting D on the MXU (A @ B.T), f32 accumulation.
    sims = lax.dot_general(
        f_ref[...].astype(compute_dtype),
        bank_ref[...].astype(compute_dtype),
        dimension_numbers=(((1,), (1,)), ((), ())),
        preferred_element_type=jnp.float32,
    )                                                     # (B, TILE_N)
    logits = sims * inv_temp                              # logit space once

    pos_mask = labels_ref[...] == blabels_ref[...]        # (1,T) == (B,1) -> (B,T)

    # Hardest positive: running min over same-label columns.
    tile_pos_min = jnp.min(jnp.where(pos_mask, logits, _POS_SENTINEL),
                           axis=-1, keepdims=True)        # (B,1)
    posmin_ref[...] = jnp.minimum(posmin_ref[...], tile_pos_min)

    # Stash masked negative logits for the selection pass on the last tile.
    neg_ref[n] = jnp.where(pos_mask, _NEG_SENTINEL, logits)

    @pl.when(n == n_tiles - 1)
    def _finalize():
        neg = neg_ref[...]                                # (n_tiles, B, T) f32
        pos = posmin_ref[...]                             # (B, 1)
        neg_max = jnp.max(jnp.max(neg, axis=0), axis=-1, keepdims=True)
        m = jnp.maximum(pos, neg_max)                     # (B,1) LSE stabilizer

        # Order-preserving int32 key: key(f) = bits if f >= 0 else bits ^ 0x7FFFFFFF.
        bits = pltpu.bitcast(neg, jnp.int32)
        flip = jnp.int32(0x7FFFFFFF)
        keys = jnp.where(bits >= 0, bits, bits ^ flip)

        kf = jnp.float32(K)
        sign = jnp.int32(-(2 ** 31))

        # 32-step bitwise binary search for the per-row K-th largest key:
        # ~32 counting passes instead of 2*K full cross-lane reductions.
        def bisect(_, carry):
            ub, bit = carry
            cand = ub | bit                               # (B,1) biased threshold bits
            thr = cand ^ sign                             # signed int32 threshold
            ind = (keys >= thr[None]).astype(jnp.float32)
            cnt = jnp.sum(jnp.sum(ind, axis=0), axis=-1, keepdims=True)
            ub = jnp.where(cnt >= kf, cand, ub)
            return ub, lax.shift_right_logical(bit, jnp.int32(1))

        ub, _ = lax.fori_loop(0, 32, bisect,
                              (jnp.zeros((B, 1), jnp.int32), sign))
        tau_key = ub ^ sign
        tau_bits = jnp.where(tau_key >= 0, tau_key, tau_key ^ flip)
        tau = pltpu.bitcast(tau_bits, jnp.float32)        # (B,1) K-th largest neg logit

        # Single accumulation pass; ties at tau are count-corrected, so this equals
        # sum(exp(.)) over exactly the K largest negatives (torch.topk semantics).
        gt = neg > tau[None]
        cnt_gt = jnp.sum(jnp.sum(gt.astype(jnp.float32), axis=0),
                         axis=-1, keepdims=True)
        e = jnp.where(gt, jnp.exp(neg - m[None]), 0.0)
        s_neg = jnp.sum(jnp.sum(e, axis=0), axis=-1, keepdims=True)
        s_neg = s_neg + (kf - cnt_gt) * jnp.exp(tau - m)

        lse = m + jnp.log(s_neg + jnp.exp(pos - m))
        loss_ref[...] = lse - pos                         # CE with target class 0, per row


def memory_loss_pallas(f, features, labels, batch_labels, *, temp, K,
                       tile_n=None, compute_dtype=jnp.bfloat16):
    B, D = f.shape
    N, Df = features.shape
    assert D == Df
    itemsize = jnp.dtype(features.dtype).itemsize
    if tile_n is None:
        tile_n = _pick_tile_n(N, D, itemsize)
    if N % tile_n != 0 or not (tile_n % 128 == 0 or tile_n == N):
        tile_n = N                                        # fall back to a single block
    n_tiles = N // tile_n

    labels2d = labels.astype(jnp.int32).reshape(1, N)
    blabels2d = batch_labels.astype(jnp.int32).reshape(B, 1)
    f_in = f.astype(compute_dtype)                        # tiny (B,D); bank tiles cast in-kernel

    kernel = functools.partial(_memory_loss_kernel, inv_temp=float(1.0 / temp),
                               K=int(K), compute_dtype=compute_dtype)

    grid_spec = pltpu.PrefetchScalarGridSpec(
        num_scalar_prefetch=0,
        grid=(n_tiles,),
        in_specs=[
            pl.BlockSpec((B, D), lambda n: (0, 0)),        # f: resident
            pl.BlockSpec((tile_n, D), lambda n: (n, 0)),   # bank: streamed, double-buffered
            pl.BlockSpec((1, tile_n), lambda n: (0, n)),   # labels tile
            pl.BlockSpec((B, 1), lambda n: (0, 0)),        # per-batch labels: resident
        ],
        out_specs=pl.BlockSpec((B, 1), lambda n: (0, 0)),
        scratch_shapes=[
            pltpu.VMEM((n_tiles, B, tile_n), jnp.float32),  # masked negative logits
            pltpu.VMEM((B, 1), jnp.float32),                # running positive min
        ],
    )
    cost = pl.CostEstimate(
        flops=int(2 * B * N * D),
        transcendentals=int(B * N),
        bytes_accessed=int(N * D * itemsize
                           + B * D * jnp.dtype(compute_dtype).itemsize
                           + N * 4 + B * 4 + B * 4),
    )
    per_sample = pl.pallas_call(
        kernel,
        out_shape=jax.ShapeDtypeStruct((B, 1), jnp.float32),
        grid_spec=grid_spec,
        compiler_params=pltpu.CompilerParams(
            dimension_semantics=("arbitrary",),
            vmem_limit_bytes=48 * 1024 * 1024),
        cost_estimate=cost,
    )(f_in, features, labels2d, blabels2d)
    return jnp.mean(per_sample)                            # CrossEntropyLoss reduction='mean'


# --------------------------------------------------------------------------------------
# Memory-bank update: in-place row gather/compute/scatter (no full-bank copy).
# --------------------------------------------------------------------------------------
def _memory_update_kernel(idx_ref, fweak_ref, bank_in_ref, bank_out_ref,
                          rows_ref, copy_sems, *, momentum):
    B, _ = fweak_ref.shape

    # Gather the B selected bank rows HBM -> VMEM (all row DMAs in flight at once).
    for i in range(B):
        pltpu.make_async_copy(bank_in_ref.at[pl.ds(idx_ref[i], 1), :],
                              rows_ref.at[pl.ds(i, 1), :],
                              copy_sems.at[i]).start()
    for i in range(B):
        pltpu.make_async_copy(bank_in_ref.at[pl.ds(idx_ref[i], 1), :],
                              rows_ref.at[pl.ds(i, 1), :],
                              copy_sems.at[i]).wait()

    mixed = (rows_ref[...].astype(jnp.float32) * momentum
             + fweak_ref[...].astype(jnp.float32) * (1.0 - momentum))
    sumsq = jnp.sum(mixed * mixed, axis=-1, keepdims=True)
    inv_norm = lax.rsqrt(jnp.maximum(sumsq, 1e-24))        # == 1/max(||x||2, 1e-12): F.normalize
    rows_ref[...] = (mixed * inv_norm).astype(rows_ref.dtype)

    # Scatter the normalized rows back in place (bank_out aliases bank_in in HBM).
    for i in range(B):
        pltpu.make_async_copy(rows_ref.at[pl.ds(i, 1), :],
                              bank_out_ref.at[pl.ds(idx_ref[i], 1), :],
                              copy_sems.at[i]).start()
    for i in range(B):
        pltpu.make_async_copy(rows_ref.at[pl.ds(i, 1), :],
                              bank_out_ref.at[pl.ds(idx_ref[i], 1), :],
                              copy_sems.at[i]).wait()


def memory_update_pallas(features, f_weak, indexes, *, momentum):
    N, D = features.shape
    B = f_weak.shape[0]
    kernel = functools.partial(_memory_update_kernel, momentum=float(momentum))
    return pl.pallas_call(
        kernel,
        out_shape=jax.ShapeDtypeStruct((N, D), features.dtype),
        in_specs=[
            pl.BlockSpec(memory_space=pltpu.MemorySpace.SMEM),   # indexes (B,)
            pl.BlockSpec(memory_space=pltpu.MemorySpace.VMEM),   # f_weak (B, D)
            pl.BlockSpec(memory_space=pl.ANY),                   # bank (N, D) stays in HBM
        ],
        out_specs=pl.BlockSpec(memory_space=pl.ANY),             # aliased bank (in place)
        scratch_shapes=[
            pltpu.VMEM((B, D), features.dtype),
            pltpu.SemaphoreType.DMA((B,)),
        ],
        input_output_aliases={2: 0},                             # index_copy_-style update
        compiler_params=pltpu.CompilerParams(has_side_effects=True),
    )(indexes.astype(jnp.int32), f_weak.astype(features.dtype), features)


def memory_forward(f, f_weak, indexes, features, labels, *, temp, momentum, K,
                   tile_n=None, compute_dtype=jnp.bfloat16):
    batch_labels = labels[indexes]                               # tiny O(B) gather (glue)
    loss = memory_loss_pallas(f, features, labels, batch_labels,
                              temp=temp, K=K, tile_n=tile_n, compute_dtype=compute_dtype)
    new_features = memory_update_pallas(features, f_weak, indexes, momentum=momentum)
    return loss, new_features


# --------------------------------------------------------------------------------------
# Pure-JAX reference for correctness checks.
# --------------------------------------------------------------------------------------
def memory_loss_ref(f, features, labels, indexes, *, temp, K, matmul_dtype=jnp.float32):
    mat = lax.dot_general(f.astype(matmul_dtype), features.astype(matmul_dtype),
                          dimension_numbers=(((1,), (1,)), ((), ())),
                          preferred_element_type=jnp.float32)
    batch_labels = labels[indexes]
    pos_mask = labels[None, :] == batch_labels[:, None]
    pos_min = jnp.min(jnp.where(pos_mask, mat, jnp.inf), axis=1, keepdims=True)
    neg_vals = jnp.where(pos_mask, -jnp.inf, mat)
    top_neg, _ = lax.top_k(neg_vals, K)
    logits = jnp.concatenate([pos_min, top_neg], axis=1) / temp
    lse = jax.scipy.special.logsumexp(logits, axis=1)
    return jnp.mean(lse - logits[:, 0])


if __name__ == "__main__":
    # Small, deterministic configuration (module defaults scaled down; every row
    # must have >= K negatives, K defaults to 1024 in the module).
    B, D, N = 8, 32, 256        # batch, num_features, num_samples
    K = 8
    temp, momentum = 0.07, 0.2

    key = jax.random.PRNGKey(0)
    k1, k2, k3, k4 = jax.random.split(key, 4)

    features = jax.random.normal(k1, (N, D), dtype=jnp.float32)
    features = features / jnp.linalg.norm(features, axis=1, keepdims=True)
    labels = jnp.arange(N, dtype=jnp.int32) % 4           # 4 classes, 64 samples each

    f = jax.random.normal(k2, (B, D), dtype=jnp.float32)
    f = f / jnp.linalg.norm(f, axis=1, keepdims=True)
    f_weak = jax.random.normal(k3, (B, D), dtype=jnp.float32)
    indexes = jax.random.permutation(k4, N)[:B].astype(jnp.int32)

    # References computed BEFORE the kernel call (the update writes the bank in place).
    features0 = jnp.copy(features)
    loss_ref_bf16 = memory_loss_ref(f, features, labels, indexes, temp=temp, K=K,
                                    matmul_dtype=jnp.bfloat16)
    loss_ref_f32 = memory_loss_ref(f, features, labels, indexes, temp=temp, K=K,
                                   matmul_dtype=jnp.float32)
    upd_ref = features[indexes] * momentum + f_weak * (1.0 - momentum)
    upd_ref = upd_ref / jnp.clip(jnp.linalg.norm(upd_ref, axis=1, keepdims=True), 1e-12)
    jax.block_until_ready((features0, loss_ref_bf16, loss_ref_f32, upd_ref))

    loss, new_features = memory_forward(
        f, f_weak, indexes, features, labels,
        temp=temp, momentum=momentum, K=K, tile_n=128)     # tile_n=128 -> 2-tile grid
    loss = jax.block_until_ready(loss)
    new_features = jax.block_until_ready(new_features)

    # Loss matches a reference that uses the same bf16 matmul rounding ...
    assert jnp.allclose(loss, loss_ref_bf16, rtol=5e-3, atol=5e-3), (loss, loss_ref_bf16)
    # ... and stays close to the full-f32 reference.
    assert jnp.allclose(loss, loss_ref_f32, rtol=1e-1, atol=1e-1), (loss, loss_ref_f32)

    # Updated rows are momentum-mixed + L2-normalized.
    assert jnp.allclose(new_features[indexes], upd_ref, rtol=1e-5, atol=1e-5)
    # Untouched rows of the bank are preserved by the in-place row update.
    mask = jnp.ones((N,), dtype=bool).at[indexes].set(False)
    assert jnp.allclose(jnp.where(mask[:, None], new_features, 0.0),
                        jnp.where(mask[:, None], features0, 0.0))

    print("KERNEL_OK")
</pallas_src>

<mosaic_0001>
module attributes {stable_mosaic.version = 11 : i64} {
  func.func @_memory_loss_kernel(%arg0: i32, %arg1: memref<8x32xbf16, #tpu.memory_space<vmem>>, %arg2: memref<128x32xf32, #tpu.memory_space<vmem>>, %arg3: memref<1x128xi32, #tpu.memory_space<vmem>>, %arg4: memref<8x1xi32, #tpu.memory_space<vmem>>, %arg5: memref<8x1xf32, #tpu.memory_space<vmem>>, %arg6: memref<2x8x128xf32, #tpu.memory_space<vmem>>, %arg7: memref<8x1xf32, #tpu.memory_space<vmem>>) attributes {dimension_semantics = [#tpu.dimension_semantics<arbitrary>], iteration_bounds = array<i64: 2>, scalar_prefetch = 0 : i64, scratch_operands = 2 : i64, tpu.core_type = #tpu.core_type<tc>, window_params = [{pipeline_mode = #tpu.pipeline_mode<synchronous>, transform_indices = @transform_0, window_bounds = array<i64: 8, 32>}, {transform_indices = @transform_1, window_bounds = array<i64: 128, 32>}, {transform_indices = @transform_2, window_bounds = array<i64: 1, 128>}, {pipeline_mode = #tpu.pipeline_mode<synchronous>, transform_indices = @transform_3, window_bounds = array<i64: 8, 1>}, {pipeline_mode = #tpu.pipeline_mode<synchronous>, transform_indices = @transform_4, window_bounds = array<i64: 8, 1>}]} {
    %c0_i32 = arith.constant 0 : i32
    %0 = arith.cmpi eq, %arg0, %c0_i32 : i32
    %1 = arith.extui %0 : i1 to i32
    %c0_i32_0 = arith.constant 0 : i32
    %2 = arith.cmpi ne, %1, %c0_i32_0 : i32
    scf.if %2 {
      %cst_19 = arith.constant 1.000000e+30 : f32
      %30 = vector.broadcast %cst_19 : f32 to vector<8x1xf32>
      %c0_20 = arith.constant 0 : index
      %c0_21 = arith.constant 0 : index
      %31 = vector.load %arg7[%c0_20, %c0_21] : memref<8x1xf32, #tpu.memory_space<vmem>>, vector<8x1xf32>
      tpu.vector_store %arg7[%c0_20, %c0_21], %30 {strides = array<i32>} : memref<8x1xf32, #tpu.memory_space<vmem>>, vector<8x1xf32>,
    } else {
    }
    %c0 = arith.constant 0 : index
    %c0_1 = arith.constant 0 : index
    %3 = vector.load %arg1[%c0, %c0_1] : memref<8x32xbf16, #tpu.memory_space<vmem>>, vector<8x32xbf16>
    %c0_2 = arith.constant 0 : index
    %c0_3 = arith.constant 0 : index
    %4 = vector.load %arg2[%c0_2, %c0_3] : memref<128x32xf32, #tpu.memory_space<vmem>>, vector<128x32xf32>
    %5 = arith.truncf %4 : vector<128x32xf32> to vector<128x32xbf16>
    %cst = arith.constant dense<0.000000e+00> : vector<8x128xf32>
    %6 = tpu.matmul %3, %5, %cst {dimension_numbers = #tpu.dot_dimension_numbers<[1], [1], [0], [0], [0, 0, 1, 0], [], []>} : vector<8x32xbf16>, vector<128x32xbf16>, vector<8x128xf32> -> vector<8x128xf32>
    %cst_4 = arith.constant 14.2857141 : f32
    %7 = vector.broadcast %cst_4 : f32 to vector<8x128xf32>
    %8 = arith.mulf %6, %7 : vector<8x128xf32>
    %c0_5 = arith.constant 0 : index
    %c0_6 = arith.constant 0 : index
    %9 = vector.load %arg3[%c0_5, %c0_6] : memref<1x128xi32, #tpu.memory_space<vmem>>, vector<1x128xi32>
    %c0_7 = arith.constant 0 : index
    %c0_8 = arith.constant 0 : index
    %10 = vector.load %arg4[%c0_7, %c0_8] : memref<8x1xi32, #tpu.memory_space<vmem>>, vector<8x1xi32>
    %11 = vector.broadcast %9 : vector<1x128xi32> to vector<8x128xi32>
    %12 = vector.broadcast %10 : vector<8x1xi32> to vector<8x128xi32>
    %13 = arith.cmpi eq, %11, %12 : vector<8x128xi32>
    %cst_9 = arith.constant 1.000000e+30 : f32
    %14 = vector.broadcast %cst_9 : f32 to vector<8x128xf32>
    %15 = arith.select %13, %8, %14 : vector<8x128xi1>, vector<8x128xf32>
    %cst_10 = arith.constant dense<0x7F800000> : vector<8xf32>
    %16 = vector.multi_reduction <minimumf>, %15, %cst_10 [1] : vector<8x128xf32> to vector<8xf32>
    %17 = vector.shape_cast %16 : vector<8xf32> to vector<8x1xf32>
    %c0_11 = arith.constant 0 : index
    %c0_12 = arith.constant 0 : index
    %18 = vector.load %arg7[%c0_11, %c0_12] : memref<8x1xf32, #tpu.memory_space<vmem>>, vector<8x1xf32>
    %19 = arith.minimumf %18, %17 : vector<8x1xf32>
    %c0_13 = arith.constant 0 : index
    %c0_14 = arith.constant 0 : index
    %20 = vector.load %arg7[%c0_13, %c0_14] : memref<8x1xf32, #tpu.memory_space<vmem>>, vector<8x1xf32>
    tpu.vector_store %arg7[%c0_13, %c0_14], %19 {strides = array<i32>} : memref<8x1xf32, #tpu.memory_space<vmem>>, vector<8x1xf32>,
    %cst_15 = arith.constant -1.000000e+30 : f32
    %21 = vector.broadcast %cst_15 : f32 to vector<8x128xf32>
    %22 = arith.select %13, %21, %8 : vector<8x128xi1>, vector<8x128xf32>
    %23 = arith.index_cast %arg0 : i32 to index
    %c0_16 = arith.constant 0 : index
    %c0_17 = arith.constant 0 : index
    %24 = vector.load %arg6[%23, %c0_16, %c0_17] : memref<2x8x128xf32, #tpu.memory_space<vmem>>, vector<1x8x128xf32>
    %25 = vector.shape_cast %24 : vector<1x8x128xf32> to vector<8x128xf32>
    %26 = vector.shape_cast %22 : vector<8x128xf32> to vector<1x8x128xf32>
    tpu.vector_store %arg6[%23, %c0_16, %c0_17], %26 {strides = array<i32>} : memref<2x8x128xf32, #tpu.memory_space<vmem>>, vector<1x8x128xf32>,
    %c1_i32 = arith.constant 1 : i32
    %27 = arith.cmpi eq, %arg0, %c1_i32 : i32
    %28 = arith.extui %27 : i1 to i32
    %c0_i32_18 = arith.constant 0 : i32
    %29 = arith.cmpi ne, %28, %c0_i32_18 : i32
    scf.if %29 {
      %c0_19 = arith.constant 0 : index
      %c0_20 = arith.constant 0 : index
      %c0_21 = arith.constant 0 : index
      %30 = vector.load %arg6[%c0_19, %c0_20, %c0_21] : memref<2x8x128xf32, #tpu.memory_space<vmem>>, vector<2x8x128xf32>
      %c0_22 = arith.constant 0 : index
      %c0_23 = arith.constant 0 : index
      %31 = vector.load %arg7[%c0_22, %c0_23] : memref<8x1xf32, #tpu.memory_space<vmem>>, vector<8x1xf32>
      %cst_24 = arith.constant dense<0xFF800000> : vector<8x128xf32>
      %32 = vector.multi_reduction <maximumf>, %30, %cst_24 [0] : vector<2x8x128xf32> to vector<8x128xf32>
      %cst_25 = arith.constant dense<0xFF800000> : vector<8xf32>
      %33 = vector.multi_reduction <maximumf>, %32, %cst_25 [1] : vector<8x128xf32> to vector<8xf32>
      %34 = vector.shape_cast %33 : vector<8xf32> to vector<8x1xf32>
      %35 = arith.maximumf %31, %34 : vector<8x1xf32>
      %36 = tpu.bitcast %30 : vector<2x8x128xf32> -> vector<2x8x128xi32>
      %c0_i32_26 = arith.constant 0 : i32
      %37 = vector.broadcast %c0_i32_26 : i32 to vector<2x8x128xi32>
      %38 = arith.cmpi sge, %36, %37 : vector<2x8x128xi32>
      %c2147483647_i32 = arith.constant 2147483647 : i32
      %39 = vector.broadcast %c2147483647_i32 : i32 to vector<2x8x128xi32>
      %40 = arith.xori %36, %39 : vector<2x8x128xi32>
      %41 = arith.select %38, %36, %40 : vector<2x8x128xi1>, vector<2x8x128xi32>
      %c0_i32_27 = arith.constant 0 : i32
      %42 = vector.broadcast %c0_i32_27 : i32 to vector<8x1xi32>
      %c-2147483648_i32 = arith.constant -2147483648 : i32
      %cst_28 = arith.constant 8.000000e+00 : f32
      %c-2147483648_i32_29 = arith.constant -2147483648 : i32
      %c0_i32_30 = arith.constant 0 : i32
      %c32_i32 = arith.constant 32 : i32
      %43 = arith.addi %c0_i32_30, %c32_i32 : i32
      %c1_i32_31 = arith.constant 1 : i32
      %44:2 = scf.for %arg8 = %c0_i32_30 to %43 step %c1_i32_31 iter_args(%arg9 = %42, %arg10 = %c-2147483648_i32_29) -> (vector<8x1xi32>, i32)  : i32 {
        %83 = vector.broadcast %arg10 : i32 to vector<8x1xi32>
        %84 = arith.ori %arg9, %83 : vector<8x1xi32>
        %85 = vector.broadcast %c-2147483648_i32 : i32 to vector<8x1xi32>
        %86 = arith.xori %84, %85 : vector<8x1xi32>
        %87 = vector.shape_cast %86 : vector<8x1xi32> to vector<1x8x1xi32>
        %88 = vector.broadcast %87 : vector<1x8x1xi32> to vector<2x8x128xi32>
        %89 = arith.cmpi sge, %41, %88 : vector<2x8x128xi32>
        %90 = arith.extui %89 : vector<2x8x128xi1> to vector<2x8x128xi32>
        %91 = arith.sitofp %90 : vector<2x8x128xi32> to vector<2x8x128xf32>
        %cst_43 = arith.constant dense<0.000000e+00> : vector<8x128xf32>
        %92 = vector.multi_reduction <add>, %91, %cst_43 [0] : vector<2x8x128xf32> to vector<8x128xf32>
        %cst_44 = arith.constant dense<0.000000e+00> : vector<8xf32>
        %93 = vector.multi_reduction <add>, %92, %cst_44 [1] : vector<8x128xf32> to vector<8xf32>
        %94 = vector.shape_cast %93 : vector<8xf32> to vector<8x1xf32>
        %95 = vector.broadcast %cst_28 : f32 to vector<8x1xf32>
        %96 = arith.cmpf oge, %94, %95 : vector<8x1xf32>
        %97 = arith.select %96, %84, %arg9 : vector<8x1xi1>, vector<8x1xi32>
        %c1_i32_45 = arith.constant 1 : i32
        %98 = arith.shrui %arg10, %c1_i32_45 : i32
        scf.yield %97, %98 : vector<8x1xi32>, i32
      }
      %c-2147483648_i32_32 = arith.constant -2147483648 : i32
      %45 = vector.broadcast %c-2147483648_i32_32 : i32 to vector<8x1xi32>
      %46 = arith.xori %44#0, %45 : vector<8x1xi32>
      %c0_i32_33 = arith.constant 0 : i32
      %47 = vector.broadcast %c0_i32_33 : i32 to vector<8x1xi32>
      %48 = arith.cmpi sge, %46, %47 : vector<8x1xi32>
      %c2147483647_i32_34 = arith.constant 2147483647 : i32
      %49 = vector.broadcast %c2147483647_i32_34 : i32 to vector<8x1xi32>
      %50 = arith.xori %46, %49 : vector<8x1xi32>
      %51 = arith.select %48, %46, %50 : vector<8x1xi1>, vector<8x1xi32>
      %52 = tpu.bitcast %51 : vector<8x1xi32> -> vector<8x1xf32>
      %53 = vector.shape_cast %52 : vector<8x1xf32> to vector<1x8x1xf32>
      %54 = vector.broadcast %53 : vector<1x8x1xf32> to vector<2x8x128xf32>
      %55 = arith.cmpf ogt, %30, %54 : vector<2x8x128xf32>
      %56 = arith.extui %55 : vector<2x8x128xi1> to vector<2x8x128xi32>
      %57 = arith.sitofp %56 : vector<2x8x128xi32> to vector<2x8x128xf32>
      %cst_35 = arith.constant dense<0.000000e+00> : vector<8x128xf32>
      %58 = vector.multi_reduction <add>, %57, %cst_35 [0] : vector<2x8x128xf32> to vector<8x128xf32>
      %cst_36 = arith.constant dense<0.000000e+00> : vector<8xf32>
      %59 = vector.multi_reduction <add>, %58, %cst_36 [1] : vector<8x128xf32> to vector<8xf32>
      %60 = vector.shape_cast %59 : vector<8xf32> to vector<8x1xf32>
      %61 = vector.shape_cast %35 : vector<8x1xf32> to vector<1x8x1xf32>
      %62 = vector.broadcast %61 : vector<1x8x1xf32> to vector<2x8x128xf32>
      %63 = arith.subf %30, %62 : vector<2x8x128xf32>
      %64 = math.exp %63 : vector<2x8x128xf32>
      %cst_37 = arith.constant 0.000000e+00 : f32
      %65 = vector.broadcast %cst_37 : f32 to vector<2x8x128xf32>
      %66 = arith.select %55, %64, %65 : vector<2x8x128xi1>, vector<2x8x128xf32>
      %cst_38 = arith.constant dense<0.000000e+00> : vector<8x128xf32>
      %67 = vector.multi_reduction <add>, %66, %cst_38 [0] : vector<2x8x128xf32> to vector<8x128xf32>
      %cst_39 = arith.constant dense<0.000000e+00> : vector<8xf32>
      %68 = vector.multi_reduction <add>, %67, %cst_39 [1] : vector<8x128xf32> to vector<8xf32>
      %69 = vector.shape_cast %68 : vector<8xf32> to vector<8x1xf32>
      %cst_40 = arith.constant 8.000000e+00 : f32
      %70 = vector.broadcast %cst_40 : f32 to vector<8x1xf32>
      %71 = arith.subf %70, %60 : vector<8x1xf32>
      %72 = arith.subf %52, %35 : vector<8x1xf32>
      %73 = math.exp %72 : vector<8x1xf32>
      %74 = arith.mulf %71, %73 : vector<8x1xf32>
      %75 = arith.addf %69, %74 : vector<8x1xf32>
      %76 = arith.subf %31, %35 : vector<8x1xf32>
      %77 = math.exp %76 : vector<8x1xf32>
      %78 = arith.addf %75, %77 : vector<8x1xf32>
      %79 = math.log %78 : vector<8x1xf32>
      %80 = arith.addf %35, %79 : vector<8x1xf32>
      %81 = arith.subf %80, %31 : vector<8x1xf32>
      %c0_41 = arith.constant 0 : index
      %c0_42 = arith.constant 0 : index
      %82 = vector.load %arg5[%c0_41, %c0_42] : memref<8x1xf32, #tpu.memory_space<vmem>>, vector<8x1xf32>
      tpu.vector_store %arg5[%c0_41, %c0_42], %81 {strides = array<i32>} : memref<8x1xf32, #tpu.memory_space<vmem>>, vector<8x1xf32>,
    } else {
    }
    return
  }
  func.func @transform_0(%arg0: i32) -> (i32, i32) {
    %c0_i32 = arith.constant 0 : i32
    %c0_i32_0 = arith.constant 0 : i32
    %c0_i32_1 = arith.constant 0 : i32
    return %c0_i32, %c0_i32_0 : i32, i32
  }
  func.func @transform_1(%arg0: i32) -> (i32, i32) {
    %c0_i32 = arith.constant 0 : i32
    %c0_i32_0 = arith.constant 0 : i32
    return %arg0, %c0_i32 : i32, i32
  }
  func.func @transform_2(%arg0: i32) -> (i32, i32) {
    %c0_i32 = arith.constant 0 : i32
    %c0_i32_0 = arith.constant 0 : i32
    return %c0_i32, %arg0 : i32, i32
  }
  func.func @transform_3(%arg0: i32) -> (i32, i32) {
    %c0_i32 = arith.constant 0 : i32
    %c0_i32_0 = arith.constant 0 : i32
    %c0_i32_1 = arith.constant 0 : i32
    return %c0_i32, %c0_i32_0 : i32, i32
  }
  func.func @transform_4(%arg0: i32) -> (i32, i32) {
    %c0_i32 = arith.constant 0 : i32
    %c0_i32_0 = arith.constant 0 : i32
    %c0_i32_1 = arith.constant 0 : i32
    return %c0_i32, %c0_i32_0 : i32, i32
  }
}

</mosaic_0001>

<llo_original>
// kernel: tpu_custom_call.1
$region0: #{tpu_custom_call.1}
  #allocation0 [shape = 'u32[]', space=smem, size = 0x4, offset = 0x4, fixed_abs, tag = 'smem constant byte address 0x4 - core index']
  #allocation1 [shape = 'u32[144,128]{1,0:T(1,128)}', space=vmem, size = 0x12000, scoped, tag = 'internal scratch']
  #allocation2 [shape = 'f32[2,8,128]{2,1,0:T(8,128)}', space=vmem, size = 0x2000, scoped, tag = 'scratch operand']
  #allocation3 [shape = 'f32[8,1]{1,0:T(8,128)}', space=vmem, size = 0x1000, scoped, tag = 'scratch operand']
  %s0 = inlined_call_operand.vmem [shape: bf16[8,32], index: 0, kind: input, shape index: {}]
  %s1 = inlined_call_operand.vmem [shape: f32[256,32], index: 1, kind: input, shape index: {}]
  %s2 = inlined_call_operand.vmem [shape: s32[1,256], index: 2, kind: input, shape index: {}]
  %s3 = inlined_call_operand.vmem [shape: s32[8,1], index: 3, kind: input, shape index: {}]
  %s4 = inlined_call_operand.vmem [shape: f32[8,1], index: 4, kind: output, shape index: {}]
  %s5 = sld [smem:[#allocation0]]
  $region64: #{tpu_custom_call.1} parent=0
    _
  %s7 = ssub.s32 1, %s5
  %s8 = scalar_select 0, %s7, %s5
  loop: start=0, step=1, limit=4
  $region2: #{tpu_custom_call.1} parent=0 // loop_pre_header
    _
  $region3: #{tpu_custom_call.1} parent=0 // loop_header
    %s10 = sphi 0, %s14
    %p11 = scmp.ge.s32.totalorder %s10, 4
    %s18 = sphi 0, %s18
    %s20 = sphi 0, %s18
    %s21 = sphi 0, %s20
    %s35 = sphi 0, %s21
    %s41 = sphi 0, %s43
    %s44 = sphi 0, %s41
    %s45 = sphi 0, %s44
    %s61 = sphi 0, %s45
    %s67 = sphi 0, %s69
    %s70 = sphi 0, %s67
    %s71 = sphi 0, %s70
    %s87 = sphi 0, %s71
    %s91 = sphi 0, %s91
    %s93 = sphi 0, %s91
    %s94 = sphi 0, %s93
    %s108 = sphi 0, %s94
    %s112 = sphi 0, %s112
    %s114 = sphi 0, %s112
    %s115 = sphi 0, %s114
    %s129 = sphi 0, %s115
  $region4: #{tpu_custom_call.1} parent=0 // loop_header_branch
    %13 = sbr.rel (%p11) target = $region8
  $region5: #{tpu_custom_call.1} parent=0 // loop_body
    %s15 = ssub.s32 %s10, 1
    %s16 = ssub.s32 %s10, 2
    %s17 = sadd.s32 %s10, 1
    %s19 = sadd.s32 %s18, 1
    %p22 = scmp.eq.s32.totalorder %s10, 1
    %p23 = scmp.ne.s32.totalorder %s18, %s20
    %p24 = scmp.eq.s32.totalorder %s10, 0
    %p25 = por %p23, %p24
    %p26 = scmp.ne.s32.totalorder %s18, %s20
    %p27 = scmp.eq.s32.totalorder %s15, 1
    %p28 = por %p26, %p27
    %p29 = scmp.ne.s32.totalorder %s20, %s21
    %p30 = scmp.eq.s32.totalorder %s15, 0
    %p31 = por %p29, %p30
    %p32 = scmp.ne.s32.totalorder %s20, %s21
    %p33 = scmp.eq.s32.totalorder %s16, 1
    %p34 = por %p32, %p33
    %p36 = scmp.ne.s32.totalorder %s21, %s35
    %p37 = scmp.eq.s32.totalorder %s16, 0
    %p38 = por %p36, %p37
    %s39 = ssub.s32 %s10, %s17
    %p40 = scmp.eq.s32.totalorder %s39, 0
    %s42 = sadd.s32 %s41, 1
    %s43 = scalar_select %p40, %s41, %s42
    %p46 = pneg %p40
    %p47 = scmp.eq.s32.totalorder %s10, 1
    %p48 = por %p46, %p47
    %p49 = scmp.ne.s32.totalorder %s41, %s44
    %p50 = scmp.eq.s32.totalorder %s10, 0
    %p51 = por %p49, %p50
    %p52 = scmp.ne.s32.totalorder %s41, %s44
    %p53 = scmp.eq.s32.totalorder %s15, 1
    %p54 = por %p52, %p53
    %p55 = scmp.ne.s32.totalorder %s44, %s45
    %p56 = scmp.eq.s32.totalorder %s15, 0
    %p57 = por %p55, %p56
    %p58 = scmp.ne.s32.totalorder %s44, %s45
    %p59 = scmp.eq.s32.totalorder %s16, 1
    %p60 = por %p58, %p59
    %p62 = scmp.ne.s32.totalorder %s45, %s61
    %p63 = scmp.eq.s32.totalorder %s16, 0
    %p64 = por %p62, %p63
    %s65 = ssub.s32 %s10, %s17
    %p66 = scmp.eq.s32.totalorder %s65, 0
    %s68 = sadd.s32 %s67, 1
    %s69 = scalar_select %p66, %s67, %s68
    %p72 = pneg %p66
    %p73 = scmp.eq.s32.totalorder %s10, 1
    %p74 = por %p72, %p73
    %p75 = scmp.ne.s32.totalorder %s67, %s70
    %p76 = scmp.eq.s32.totalorder %s10, 0
    %p77 = por %p75, %p76
    %p78 = scmp.ne.s32.totalorder %s67, %s70
    %p79 = scmp.eq.s32.totalorder %s15, 1
    %p80 = por %p78, %p79
    %p81 = scmp.ne.s32.totalorder %s70, %s71
    %p82 = scmp.eq.s32.totalorder %s15, 0
    %p83 = por %p81, %p82
    %p84 = scmp.ne.s32.totalorder %s70, %s71
    %p85 = scmp.eq.s32.totalorder %s16, 1
    %p86 = por %p84, %p85
    %p88 = scmp.ne.s32.totalorder %s71, %s87
    %p89 = scmp.eq.s32.totalorder %s16, 0
    %p90 = por %p88, %p89
    %s92 = sadd.s32 %s91, 1
    %p95 = scmp.eq.s32.totalorder %s10, 1
    %p96 = scmp.ne.s32.totalorder %s91, %s93
    %p97 = scmp.eq.s32.totalorder %s10, 0
    %p98 = por %p96, %p97
    %p99 = scmp.ne.s32.totalorder %s91, %s93
    %p100 = scmp.eq.s32.totalorder %s15, 1
    %p101 = por %p99, %p100
    %p102 = scmp.ne.s32.totalorder %s93, %s94
    %p103 = scmp.eq.s32.totalorder %s15, 0
    %p104 = por %p102, %p103
    %p105 = scmp.ne.s32.totalorder %s93, %s94
    %p106 = scmp.eq.s32.totalorder %s16, 1
    %p107 = por %p105, %p106
    %p109 = scmp.ne.s32.totalorder %s94, %s108
    %p110 = scmp.eq.s32.totalorder %s16, 0
    %p111 = por %p109, %p110
    %s113 = sadd.s32 %s112, 1
    %p116 = scmp.eq.s32.totalorder %s10, 1
    %p117 = scmp.ne.s32.totalorder %s112, %s114
    %p118 = scmp.eq.s32.totalorder %s10, 0
    %p119 = por %p117, %p118
    %p120 = scmp.ne.s32.totalorder %s112, %s114
    %p121 = scmp.eq.s32.totalorder %s15, 1
    %p122 = por %p120, %p121
    %p123 = scmp.ne.s32.totalorder %s114, %s115
    %p124 = scmp.eq.s32.totalorder %s15, 0
    %p125 = por %p123, %p124
    %p126 = scmp.ne.s32.totalorder %s114, %s115
    %p127 = scmp.eq.s32.totalorder %s16, 1
    %p128 = por %p126, %p127
    %p130 = scmp.ne.s32.totalorder %s115, %s129
    %p131 = scmp.eq.s32.totalorder %s16, 0
    %p132 = por %p130, %p131
    %p133 = scmp.le.s32.totalorder 1, %s10
    %p134 = scmp.lt.s32.totalorder %s10, 3
    %p135 = pnand %p133, %p134
    %p136 = pneg %p135
    // Predicated region
    $region9: #{tpu_custom_call.1} parent=5 // pred_check
      _
    $region10: #{tpu_custom_call.1} parent=5 // pred_check_branch
      %138 = sbr.rel (%p135) target = $region12
    $region11: #{tpu_custom_call.1} parent=5 // pred_region
      %s139 = ssub.s32 %s10, 1
      // Predicated region
      $region13: #{tpu_custom_call.1} parent=11 // pred_check
        %p140 = pneg %p31
      $region14: #{tpu_custom_call.1} parent=11 // pred_check_branch
        %142 = sbr.rel (%p140) target = $region16
      $region15: #{tpu_custom_call.1} parent=11 // pred_region
        _
      $region16: #{tpu_custom_call.1} parent=11 // pred_fallthru
        _
      // Predicated region
      $region17: #{tpu_custom_call.1} parent=11 // pred_check
        %p143 = pneg %p104
      $region18: #{tpu_custom_call.1} parent=11 // pred_check_branch
        %145 = sbr.rel (%p143) target = $region20
      $region19: #{tpu_custom_call.1} parent=11 // pred_region
        _
      $region20: #{tpu_custom_call.1} parent=11 // pred_fallthru
        _
    $region12: #{tpu_custom_call.1} parent=5 // pred_fallthru
      _
    %p146 = scmp.lt.s32.totalorder %s10, 2
    // Predicated region
    $region21: #{tpu_custom_call.1} parent=5 // pred_check
      %p147 = pneg %p146
    $region22: #{tpu_custom_call.1} parent=5 // pred_check_branch
      %149 = sbr.rel (%p147) target = $region24
    $region23: #{tpu_custom_call.1} parent=5 // pred_region
      // Predicated region
      $region25: #{tpu_custom_call.1} parent=23 // pred_check
        %p150 = pneg %p51
      $region26: #{tpu_custom_call.1} parent=23 // pred_check_branch
        %152 = sbr.rel (%p150) target = $region28
      $region27: #{tpu_custom_call.1} parent=23 // pred_region
        %s153 = smul.u32 16, %s10
        %p154 = scmp.lt.s32.totalorder %s153, 31
        %s155 = scalar_select %p154, %s153, 31
        %s156 = smul.addr %s155, 8
        %s157 = scalar_lea.vmem %s1, %s156
        %s158 = smul.u32 16, %s10
      $region28: #{tpu_custom_call.1} parent=23 // pred_fallthru
        _
      // Predicated region
      $region29: #{tpu_custom_call.1} parent=23 // pred_check
        %p159 = pneg %p77
      $region30: #{tpu_custom_call.1} parent=23 // pred_check_branch
        %161 = sbr.rel (%p159) target = $region32
      $region31: #{tpu_custom_call.1} parent=23 // pred_region
        %p162 = scmp.lt.s32.totalorder %s10, 1
        %s163 = scalar_select %p162, %s10, 1
        %s164 = scalar_lea.vmem %s2, %s163
      $region32: #{tpu_custom_call.1} parent=23 // pred_fallthru
        _
    $region24: #{tpu_custom_call.1} parent=5 // pred_fallthru
      _
    %p165 = scmp.le.s32.totalorder 1, %s10
    %p166 = scmp.lt.s32.totalorder %s10, 3
    %p167 = pnand %p165, %p166
    %p168 = pneg %p167
    // Predicated region
    $region33: #{tpu_custom_call.1} parent=5 // pred_check
      _
    $region34: #{tpu_custom_call.1} parent=5 // pred_check_branch
      %170 = sbr.rel (%p167) target = $region36
    $region35: #{tpu_custom_call.1} parent=5 // pred_region
      %s171 = ssub.s32 %s10, 1
      %p172 = pneg %p31
      %p173 = pneg %p28
      %s174 = smul.u32 16, %s15
      %p175 = scmp.lt.s32.totalorder %s174, 31
      %s176 = scalar_select %p175, %s174, 31
      %s177 = smul.addr %s176, 8
      %s178 = scalar_lea.vmem %s1, %s177
      %p179 = pneg %p57
      %p180 = pneg %p54
      %p181 = scmp.lt.s32.totalorder %s15, 1
      %s182 = scalar_select %p181, %s15, 1
      %s183 = scalar_lea.vmem %s2, %s182
      %p184 = pneg %p83
      %p185 = pneg %p80
      %p186 = pneg %p104
      %p187 = pneg %p101
      %p188 = pneg %p125
      %p189 = pneg %p122
      %s190 = smul.u32 16, %s15
      %p191 = scmp.lt.s32.totalorder %s190, 31
      %s192 = scalar_select %p191, %s190, 31
      %s193 = smul.addr %s192, 8
      %s194 = scalar_lea.vmem %s1, %s193
      %s195 = smul.u32 16, %s15
      %p196 = scmp.lt.s32.totalorder %s15, 1
      %s197 = scalar_select %p196, %s15, 1
      %s198 = scalar_lea.vmem %s2, %s197
      %p200 = scmp.eq.s32.totalorder %s15, 0
      // Predicated region
      $region37: #{tpu_custom_call.1} parent=35 // pred_check
        %p201 = pneg %p200
      $region38: #{tpu_custom_call.1} parent=35 // pred_check_branch
        %203 = sbr.rel (%p201) target = $region40
      $region39: #{tpu_custom_call.1} parent=35 // pred_region
        %vm204 = vcmask 7168
        %205 = vst.msk [vmem:[#allocation3] sm:$0xff] %vm204, 1e+30
      $region40: #{tpu_custom_call.1} parent=35 // pred_fallthru
        _
      %v206 = vld [vmem:[%s0] sm:$0xf]
      %v207 = vld [vmem:[%s194] sm:$0xff]
      %v208 = vld [vmem:[%s194 + $0x8] sm:$0xff]
      %v209 = vld [vmem:[%s194 + $0x10] sm:$0xff]
      %v210 = vld [vmem:[%s194 + $0x18] sm:$0xff]
      %v211 = vld [vmem:[%s194 + $0x20] sm:$0xff]
      %v212 = vld [vmem:[%s194 + $0x28] sm:$0xff]
      %v213 = vld [vmem:[%s194 + $0x30] sm:$0xff]
      %v214 = vld [vmem:[%s194 + $0x38] sm:$0xff]
      %v215 = vld [vmem:[%s194 + $0x40] sm:$0xff]
      %v216 = vld [vmem:[%s194 + $0x48] sm:$0xff]
      %v217 = vld [vmem:[%s194 + $0x50] sm:$0xff]
      %v218 = vld [vmem:[%s194 + $0x58] sm:$0xff]
      %v219 = vld [vmem:[%s194 + $0x60] sm:$0xff]
      %v220 = vld [vmem:[%s194 + $0x68] sm:$0xff]
      %v221 = vld [vmem:[%s194 + $0x70] sm:$0xff]
      %v222 = vld [vmem:[%s194 + $0x78] sm:$0xff]
      %v223 = vpack.c.bf16 %v208, %v207
      %v224 = vpack.c.bf16 %v210, %v209
      %v225 = vpack.c.bf16 %v212, %v211
      %v226 = vpack.c.bf16 %v214, %v213
      %v227 = vpack.c.bf16 %v216, %v215
      %v228 = vpack.c.bf16 %v218, %v217
      %v229 = vpack.c.bf16 %v220, %v219
      %v230 = vpack.c.bf16 %v222, %v221
      %vm231 = vcmask 261120
      %v233 = vsel %vm231, %v206, 0
      %v236 = vsel %vm231, %v223, 0
      %v239 = vsel %vm231, %v224, 0
      %v242 = vsel %vm231, %v225, 0
      %v245 = vsel %vm231, %v226, 0
      %v248 = vsel %vm231, %v227, 0
      %v251 = vsel %vm231, %v228, 0
      %v254 = vsel %vm231, %v229, 0
      %v257 = vsel %vm231, %v230, 0
      %259 = vmatprep.subr.bf16.mxu0 0
      %260 = vmatpush1.bf16.xpose.msra.mxu0 %v236
      %261 = vmatprep.subr.bf16.mxu0 0
      %262 = vmatpush1.bf16.xpose.msra.mxu0 %v239
      %263 = vmatprep.subr.bf16.mxu0 0
      %264 = vmatpush1.bf16.xpose.msra.mxu0 %v242
      %265 = vmatprep.subr.bf16.mxu0 0
      %266 = vmatpush1.bf16.xpose.msra.mxu0 %v245
      %267 = vmatprep.subr.bf16.mxu0 0
      %268 = vmatpush1.bf16.xpose.msra.mxu0 %v248
      %269 = vmatprep.subr.bf16.mxu0 0
      %270 = vmatpush1.bf16.xpose.msra.mxu0 %v251
      %271 = vmatprep.subr.bf16.mxu0 0
      %272 = vmatpush1.bf16.xpose.msra.mxu0 %v254
      %273 = vmatprep.subr.bf16.mxu0 0
      %274 = vmatpush1.bf16.xpose.msra.mxu0 %v257
      %275 = vmatprep.subr.bf16.mxu0 0
      %276 = vmatpush1.bf16.xpose.msra.mxu0 0
      %277 = vmatprep.subr.bf16.mxu0 0
      %278 = vmatpush1.bf16.xpose.msra.mxu0 0
      %279 = vmatprep.subr.bf16.mxu0 0
      %280 = vmatpush1.bf16.xpose.msra.mxu0 0
      %281 = vmatprep.subr.bf16.mxu0 0
      %282 = vmatpush1.bf16.xpose.msra.mxu0 0
      %283 = vmatprep.subr.bf16.mxu0 0
      %284 = vmatpush1.bf16.xpose.msra.mxu0 0
      %285 = vmatprep.subr.bf16.mxu0 0
      %286 = vmatpush1.bf16.xpose.msra.mxu0 0
      %287 = vmatprep.subr.bf16.mxu0 0
      %288 = vmatpush1.bf16.xpose.msra.mxu0 0
      %289 = vmatprep.subr.bf16.mxu0 0
      %290 = vmatpush1.bf16.xpose.msra.mxu0 0
      %291 = vmatprep.mubr.bf16.mxu0 0
      %292 = vmatmul.mubr.bf16.gmra.mrb[0].mxu0 %v233
      %v293 = vpop.f32.mrb[0].mxu0
      %v294 = vadd.f32 0.0, %v293
      %v295 = vpop.f32.mrb[0].mxu0
      %v296 = vpop.f32.mrb[0].mxu0
      %v297 = vpop.f32.mrb[0].mxu0
      %298 = vdwg.mxu0
      %v299 = vmul.f32 %v294, 14.285714
      %v300 = vld [vmem:[%s198] sm:$0x1]
      %v301 = vld [vmem:[%s3] sm:$0xff]
      %v302 = vlaneseq
      %v303 = vshrl.u32 %v302, 7
      %v304 = vsub.s32 0, %v303
      %v305 = vrot.slane %v300, %v304
      %306 = vset.pattern.permute.xlu0 0
      %307 = vperm.xlu0 %306, %v301
      %v308 = vpop.permute.xlu0 %307
      %vm309 = vcmp.eq.s32.totalorder %v305, %v308
      %v310 = vsel %vm309, %v299, 1e+30
      %311 = vmin.xlane.f32.xlu0 %v310
      %v312 = vpop.xlane.xlu0 %311
      %v313 = vld [vmem:[#allocation3] sm:$0xff]
      %v314 = vmin.f32 %v313, %v312
      %vm315 = vcmask 7168
      %316 = vst.msk [vmem:[#allocation3] sm:$0xff] %vm315, %v314
      %v317 = vsel %vm309, -1e+30, %v299
      %s318 = smul.u32 %s15, 8
      %s319 = scalar_lea.vmem [#allocation2], %s318
      %320 = vst [vmem:[%s319] sm:$0xff] %v317
      %p321 = scmp.eq.s32.totalorder %s15, 1
      // Predicated region
      $region41: #{tpu_custom_call.1} parent=35 // pred_check
        %p322 = pneg %p321
      $region42: #{tpu_custom_call.1} parent=35 // pred_check_branch
        %324 = sbr.rel (%p322) target = $region44
      $region43: #{tpu_custom_call.1} parent=35 // pred_region
        %v325 = vld [vmem:[#allocation2] sm:$0xff]
        %v326 = vld [vmem:[#allocation2 + $0x8] sm:$0xff]
        %v327 = vld [vmem:[#allocation3] sm:$0xff]
        %v328 = vmax.f32 %v325, %v326
        %329 = vmax.xlane.f32.xlu0 %v328
        %v330 = vpop.xlane.xlu0 %329
        %v331 = vmax.f32 %v327, %v330
        %vm334 = vcmp.ge.s32.totalorder %v325, 0
        %vm335 = vcmp.ge.s32.totalorder %v326, 0
        %v336 = vxor.u32 %v325, 2147483647
        %v337 = vxor.u32 %v326, 2147483647
        %v338 = vsel %vm334, %v325, %v336
        %v339 = vsel %vm335, %v326, %v337
        loop: start=0, step=1, limit=32
        $region45: #{tpu_custom_call.1} parent=43 // loop_pre_header
          _
        $region46: #{tpu_custom_call.1} parent=43 // loop_header
          %s341 = sphi 0, %s345
          %p342 = scmp.ge.s32.totalorder %s341, 32
          %v346 = vphi 0, %v361
          %s347 = sphi 2147483648, %s362
        $region47: #{tpu_custom_call.1} parent=43 // loop_header_branch
          %344 = sbr.rel (%p342) target = $region51
        $region48: #{tpu_custom_call.1} parent=43 // loop_body
          %v348 = vstv %s347
          %v349 = vor.u32 %v346, %v348
          %v350 = vxor.u32 %v349, 2147483648
          %vm351 = vcmp.ge.s32.totalorder %v338, %v350
          %vm352 = vcmp.ge.s32.totalorder %v339, %v350
          %v353 = vsel %vm351, 1, 0
          %v354 = vsel %vm352, 1, 0
          %v355 = vcvt.s32.f32 %v353
          %v356 = vcvt.s32.f32 %v354
          %v357 = vadd.f32 %v355, %v356
          %358 = vadd.xlane.f32.xlu0 %v357
          %v359 = vpop.xlane.xlu0 %358
          %vm360 = vcmp.ge.f32.partialorder %v359, 8.0
          %v361 = vsel %vm360, %v349, %v346
          %s362 = sshrl.u32 %s347, 1
        $region49: #{tpu_custom_call.1} parent=43 // loop_footer
          %s345 = sadd.s32 1, %s341
        $region50: #{tpu_custom_call.1} parent=43 // loop_footer_branch
          %340 = sbr.rel target = $region46
        $region51: #{tpu_custom_call.1} parent=43 // loop_exit
          _
        %v363 = vxor.u32 %v346, 2147483648
        %vm364 = vcmp.ge.s32.totalorder %v363, 0
        %v365 = vxor.u32 %v363, 2147483647
        %v366 = vsel %vm364, %v363, %v365
        %vm368 = vcmp.gt.f32.partialorder %v325, %v366
        %vm369 = vcmp.gt.f32.partialorder %v326, %v366
        %v370 = vsel %vm368, 1, 0
        %v371 = vsel %vm369, 1, 0
        %v372 = vcvt.s32.f32 %v370
        %v373 = vcvt.s32.f32 %v371
        %v374 = vadd.f32 %v372, %v373
        %375 = vadd.xlane.f32.xlu0 %v374
        %v376 = vpop.xlane.xlu0 %375
        %378 = vset.pattern.permute.xlu0 0
        %379 = vperm.xlu0 %378, %v331
        %v380 = vpop.permute.xlu0 %379
        %v382 = vsub.f32 %v325, %v380
        %v383 = vsub.f32 %v326, %v380
        %v384 = vmul.f32 %v382, 1.442695
        %v385 = vpow.pop %v384
        %v386 = vmul.f32 %v383, 1.442695
        %v387 = vpow.pop %v386
        %v388 = vsel %vm368, %v385, 0.0
        %v389 = vsel %vm369, %v387, 0.0
        %v390 = vadd.f32 %v388, %v389
        %391 = vadd.xlane.f32.xlu0 %v390
        %v392 = vpop.xlane.xlu0 %391
        %v393 = vsub.f32 8.0, %v376
        %v394 = vsub.f32 %v366, %v331
        %v395 = vmul.f32 %v394, 1.442695
        %v396 = vpow.pop %v395
        %v397 = vmul.f32 %v393, %v396
        %v398 = vadd.f32 %v392, %v397
        %v399 = vsub.f32 %v327, %v331
        %v400 = vmul.f32 %v399, 1.442695
        %v401 = vpow.pop %v400
        %v402 = vadd.f32 %v398, %v401
        %v403 = vlog2.pop %v402
        %v404 = vmul.f32 %v403, 0.6931472
        %v405 = vadd.f32 %v331, %v404
        %v406 = vsub.f32 %v405, %v327
        %407 = vst.msk [vmem:[%s4] sm:$0xff] %vm315, %v406
      $region44: #{tpu_custom_call.1} parent=35 // pred_fallthru
        _
      // Predicated region
      $region52: #{tpu_custom_call.1} parent=35 // pred_check
        %p408 = pneg %p122
      $region53: #{tpu_custom_call.1} parent=35 // pred_check_branch
        %410 = sbr.rel (%p408) target = $region55
      $region54: #{tpu_custom_call.1} parent=35 // pred_region
        _
      $region55: #{tpu_custom_call.1} parent=35 // pred_fallthru
        _
      // Predicated region
      $region56: #{tpu_custom_call.1} parent=35 // pred_check
        %p411 = pneg %p122
      $region57: #{tpu_custom_call.1} parent=35 // pred_check_branch
        %413 = sbr.rel (%p411) target = $region59
      $region58: #{tpu_custom_call.1} parent=35 // pred_region
        _
      $region59: #{tpu_custom_call.1} parent=35 // pred_fallthru
        _
    $region36: #{tpu_custom_call.1} parent=5 // pred_fallthru
      _
    %p414 = scmp.le.s32.totalorder 2, %s10
    // Predicated region
    $region60: #{tpu_custom_call.1} parent=5 // pred_check
      %p415 = pneg %p414
    $region61: #{tpu_custom_call.1} parent=5 // pred_check_branch
      %417 = sbr.rel (%p415) target = $region63
    $region62: #{tpu_custom_call.1} parent=5 // pred_region
      %s418 = ssub.s32 %s10, 2
    $region63: #{tpu_custom_call.1} parent=5 // pred_fallthru
      _
  $region6: #{tpu_custom_call.1} parent=0 // loop_footer
    %s14 = sadd.s32 1, %s10
  $region7: #{tpu_custom_call.1} parent=0 // loop_footer_branch
    %9 = sbr.rel target = $region3
  $region8: #{tpu_custom_call.1} parent=0 // loop_exit
    _

</llo_original>
